<compile_context>
chip_gen: v5e
topology: v5e:2x2
jax: 0.10.0
libtpu: 0.0.40
codegen_flags: <defaults>
</compile_context>

<pallas_src>
import numpy as np
import jax
import jax.numpy as jnp
from jax import lax
from jax.experimental import pallas as pl
from jax.experimental.pallas import tpu as pltpu

THETA = 0.7  # Conv2d_cd default theta


def _interp_matrix(out_size: int, in_size: int) -> np.ndarray:
    """1-D bilinear interpolation matrix, PyTorch align_corners=True semantics."""
    if out_size == 1:
        src = np.zeros((1,), np.float64)
    else:
        src = np.arange(out_size, dtype=np.float64) * (in_size - 1) / (out_size - 1)
    i0 = np.clip(np.floor(src).astype(np.int64), 0, in_size - 1)
    i1 = np.minimum(i0 + 1, in_size - 1)
    f = src - i0
    A = np.zeros((out_size, in_size), np.float32)
    A[np.arange(out_size), i0] += (1.0 - f).astype(np.float32)
    A[np.arange(out_size), i1] += f.astype(np.float32)
    return A


def _skipup_kernel(w_ref, p_ref, o_ref):
    # w_ref: (Cout, 9*Cin)        bf16  folded conv weights (theta absorbed into center tap)
    # p_ref: (9*Cin, col_block)   bf16  interp-folded im2col patches, columns = (n, ho, wo)
    # o_ref: (Cout, col_block)    f32   lane-dense store (col_block is a multiple of 128)
    o_ref[...] = jnp.dot(w_ref[...], p_ref[...], preferred_element_type=jnp.float32)


def skip_up(x_nchw, weight_oihw, scale_factor=2):
    """SkipUp forward: y = upsample_bilinear(conv_cd(x)).  Input/output NCHW."""
    N, Cin, H, W = x_nchw.shape
    Cout = weight_oihw.shape[0]
    Ho, Wo = int(round(H * scale_factor)), int(round(W * scale_factor))
    K = 9 * Cin
    total_cols = N * Ho * Wo

    # ---- wrapper-side layout plumbing + linear-operator folding (f32) ----
    x = jnp.asarray(x_nchw, jnp.float32)
    xpad = jnp.pad(x, ((0, 0), (0, 0), (1, 1), (1, 1)))              # zero pad=1
    # im2col rows ordered ((ky*3+kx)*Cin + ci); spatial kept as (N, H, W)
    taps = jnp.stack([xpad[:, :, ky:ky + H, kx:kx + W]
                      for ky in range(3) for kx in range(3)], axis=0)  # (9,N,Cin,H,W)
    patches = jnp.transpose(taps, (0, 2, 1, 3, 4))                    # (9,Cin,N,H,W)

    # conv (channel/tap axes) and bilinear interp (spatial axes) commute:
    # upsample(conv(x)) == conv(upsample-folded patches).  Fold interp in f32 here.
    A_h = jnp.asarray(_interp_matrix(Ho, H))                          # (Ho, H)
    A_w = jnp.asarray(_interp_matrix(Wo, W))                          # (Wo, W)
    p_h = jnp.einsum('kcnhw,ah->kcnaw', patches, A_h)
    p_hw = jnp.einsum('kcnaw,bw->kcnab', p_h, A_w)                    # (9,Cin,N,Ho,Wo)
    p_cols = p_hw.reshape(K, total_cols).astype(jnp.bfloat16)

    # fold central-difference term into the center tap: W[:,:,1,1] -= theta * sum(W)
    w = jnp.asarray(weight_oihw, jnp.float32)
    w_adj = w.at[:, :, 1, 1].add(-THETA * jnp.sum(w, axis=(2, 3)))
    wfold = jnp.transpose(w_adj, (0, 2, 3, 1)).reshape(Cout, K).astype(jnp.bfloat16)

    # ---- column tiling: one step at the test shape; bounded blocks at production scale ----
    max_block_cols = 4096
    col_block = total_cols
    if total_cols > max_block_cols:
        col_block = 128
        for cand in range(max_block_cols, 127, -128):
            if total_cols % cand == 0:
                col_block = cand
                break
    grid = (total_cols // col_block,)

    flops = 2 * Cout * K * total_cols
    bytes_accessed = K * total_cols * 2 + Cout * K * 2 + Cout * total_cols * 4
    vmem_limit = int(min(max(2 * (K * col_block * 2 + Cout * col_block * 4)
                             + Cout * K * 2 + (1 << 20), 8 << 20), 64 << 20))

    out = pl.pallas_call(
        _skipup_kernel,
        out_shape=jax.ShapeDtypeStruct((Cout, total_cols), jnp.float32),
        grid=grid,
        in_specs=[
            pl.BlockSpec((Cout, K), lambda j: (0, 0),
                         pipeline_mode=pl.Buffered(1)),               # grid-invariant weights
            pl.BlockSpec((K, col_block), lambda j: (0, j)),
        ],
        out_specs=pl.BlockSpec((Cout, col_block), lambda j: (0, j)),
        compiler_params=pltpu.CompilerParams(
            dimension_semantics=("parallel",),
            vmem_limit_bytes=vmem_limit),
        cost_estimate=pl.CostEstimate(flops=flops, transcendentals=0,
                                      bytes_accessed=bytes_accessed),
    )(wfold, p_cols)

    # columns are ordered (n, ho, wo) -> tiny wrapper transpose back to NCHW (layout only).
    return jnp.transpose(out.reshape(Cout, N, Ho, Wo), (1, 0, 2, 3))


def skip_up_reference(x_nchw, weight_oihw, scale_factor=2):
    """Pure-JAX f32 reference (lax.conv + explicit bilinear align_corners=True)."""
    N, Cin, H, W = x_nchw.shape
    Ho, Wo = int(round(H * scale_factor)), int(round(W * scale_factor))
    x_nhwc = jnp.transpose(x_nchw, (0, 2, 3, 1)).astype(jnp.float32)
    w_hwio = jnp.transpose(weight_oihw, (2, 3, 1, 0)).astype(jnp.float32)
    dn = ('NHWC', 'HWIO', 'NHWC')
    out_normal = lax.conv_general_dilated(x_nhwc, w_hwio, (1, 1), ((1, 1), (1, 1)),
                                          dimension_numbers=dn,
                                          precision=lax.Precision.HIGHEST)
    w_diff = jnp.sum(w_hwio, axis=(0, 1), keepdims=True)              # (1,1,Cin,Cout)
    out_diff = lax.conv_general_dilated(x_nhwc, w_diff, (1, 1), 'VALID',
                                        dimension_numbers=dn,
                                        precision=lax.Precision.HIGHEST)
    y = out_normal - THETA * out_diff                                  # (N,H,W,Cout)

    hs = jnp.arange(Ho) * (H - 1) / (Ho - 1)
    ws = jnp.arange(Wo) * (W - 1) / (Wo - 1)
    h0 = jnp.floor(hs).astype(jnp.int32); h1 = jnp.minimum(h0 + 1, H - 1)
    w0 = jnp.floor(ws).astype(jnp.int32); w1 = jnp.minimum(w0 + 1, W - 1)
    hf = (hs - h0).astype(jnp.float32); wf = (ws - w0).astype(jnp.float32)
    yh0, yh1 = y[:, h0], y[:, h1]
    top = yh0[:, :, w0] * (1 - wf)[None, None, :, None] + yh0[:, :, w1] * wf[None, None, :, None]
    bot = yh1[:, :, w0] * (1 - wf)[None, None, :, None] + yh1[:, :, w1] * wf[None, None, :, None]
    up = top * (1 - hf)[None, :, None, None] + bot * hf[None, :, None, None]
    return jnp.transpose(up, (0, 3, 1, 2))


if __name__ == "__main__":
    N, Cin, Cout, H, W, scale = 2, 4, 8, 16, 16, 2
    key = jax.random.PRNGKey(0)
    kx, kw = jax.random.split(key)
    x = jax.random.normal(kx, (N, Cin, H, W), dtype=jnp.float32)
    weight = 0.1 * jax.random.normal(kw, (Cout, Cin, 3, 3), dtype=jnp.float32)

    out = jax.block_until_ready(skip_up(x, weight, scale))
    ref = jax.block_until_ready(skip_up_reference(x, weight, scale))

    assert out.shape == (N, Cout, H * scale, W * scale), out.shape
    # bf16 MXU operands (single-pass) vs f32-HIGHEST reference -> loosened tolerance.
    np.testing.assert_allclose(np.asarray(out), np.asarray(ref), rtol=3e-2, atol=3e-2)
    print("KERNEL_OK")
</pallas_src>

<mosaic_0001>
module attributes {stable_mosaic.version = 11 : i64} {
  func.func @_skipup_kernel(%arg0: i32, %arg1: memref<8x36xbf16, #tpu.memory_space<vmem>>, %arg2: memref<36x2048xbf16, #tpu.memory_space<vmem>>, %arg3: memref<8x2048xf32, #tpu.memory_space<vmem>>) attributes {dimension_semantics = [#tpu.dimension_semantics<parallel>], iteration_bounds = array<i64: 1>, scalar_prefetch = 0 : i64, scratch_operands = 0 : i64, tpu.core_type = #tpu.core_type<tc>, window_params = [{pipeline_mode = #tpu.pipeline_mode<synchronous>, transform_indices = @transform_0, window_bounds = array<i64: 8, 36>}, {transform_indices = @transform_1, window_bounds = array<i64: 36, 2048>}, {transform_indices = @transform_2, window_bounds = array<i64: 8, 2048>}]} {
    %c0 = arith.constant 0 : index
    %c0_0 = arith.constant 0 : index
    %0 = vector.load %arg1[%c0, %c0_0] : memref<8x36xbf16, #tpu.memory_space<vmem>>, vector<8x36xbf16>
    %c0_1 = arith.constant 0 : index
    %c0_2 = arith.constant 0 : index
    %1 = vector.load %arg2[%c0_1, %c0_2] : memref<36x2048xbf16, #tpu.memory_space<vmem>>, vector<36x2048xbf16>
    %cst = arith.constant dense<0.000000e+00> : vector<8x2048xf32>
    %2 = tpu.matmul %0, %1, %cst {dimension_numbers = #tpu.dot_dimension_numbers<[1], [0], [0], [1], [0, 0, 1, 1], [], []>} : vector<8x36xbf16>, vector<36x2048xbf16>, vector<8x2048xf32> -> vector<8x2048xf32>
    %c0_3 = arith.constant 0 : index
    %c0_4 = arith.constant 0 : index
    %3 = vector.load %arg3[%c0_3, %c0_4] : memref<8x2048xf32, #tpu.memory_space<vmem>>, vector<8x2048xf32>
    tpu.vector_store %arg3[%c0_3, %c0_4], %2 {strides = array<i32>} : memref<8x2048xf32, #tpu.memory_space<vmem>>, vector<8x2048xf32>,
    return
  }
  func.func @transform_0(%arg0: i32) -> (i32, i32) {
    %c0_i32 = arith.constant 0 : i32
    %c0_i32_0 = arith.constant 0 : i32
    %c0_i32_1 = arith.constant 0 : i32
    return %c0_i32, %c0_i32_0 : i32, i32
  }
  func.func @transform_1(%arg0: i32) -> (i32, i32) {
    %c0_i32 = arith.constant 0 : i32
    %c0_i32_0 = arith.constant 0 : i32
    return %c0_i32, %arg0 : i32, i32
  }
  func.func @transform_2(%arg0: i32) -> (i32, i32) {
    %c0_i32 = arith.constant 0 : i32
    %c0_i32_0 = arith.constant 0 : i32
    return %c0_i32, %arg0 : i32, i32
  }
}

</mosaic_0001>

<llo_original>
// kernel: tpu_custom_call.1
$region0: #{tpu_custom_call.1}
  #allocation0 [shape = 'u32[]', space=smem, size = 0x4, offset = 0x4, fixed_abs, tag = 'smem constant byte address 0x4 - core index']
  #allocation1 [shape = 'u32[72,128]{1,0:T(1,128)}', space=vmem, size = 0x9000, scoped, tag = 'internal scratch']
  %s0 = inlined_call_operand.hbm [shape: bf16[8,36], index: 0, kind: input, shape index: {}]
  %s1 = inlined_call_operand.hbm [shape: bf16[36,2048], index: 1, kind: input, shape index: {}]
  %s2 = inlined_call_operand.hbm [shape: f32[8,2048], index: 2, kind: output, shape index: {}]
  %s3 = sld [smem:[#allocation0]]
  $region26: #{tpu_custom_call.1} parent=0
    _
  %s5 = ssub.s32 1, %s3
  %s6 = scalar_select 0, %s5, %s3
  $region1: #{tpu_custom_call.1} parent=0
    #allocation2 [shape = 'u8[2048]{0}', space=vmem, size = 0x800, scoped, tag = 'input window, operand 0, single buffered']
    #allocation3 [shape = 's32[1]{0}', space=sflag, size = 0x4, scoped, tag = 'scoped memory for tpu_custom_call.1']
    #allocation4 [shape = 's32[1]{0}', space=sflag, size = 0x4, scoped, tag = 'scoped memory for tpu_custom_call.1']
    #allocation5 [shape = 'u8[163840]{0}', space=vmem, size = 0x28000, scoped, tag = 'input window, operand 1, single buffered']
    #allocation6 [shape = 's32[1]{0}', space=sflag, size = 0x4, scoped, tag = 'scoped memory for tpu_custom_call.1']
    #allocation7 [shape = 'u8[65536]{0}', space=vmem, size = 0x10000, scoped, tag = 'output window, operand 0, single buffered']
    %7 = vsyncpa [#allocation3], 0
    %8 = vsyncpa [#allocation6], 0
    %9 = vsyncpa [#allocation4], 0
    // Predicated region
    $region2: #{tpu_custom_call.1} parent=1 // pred_check
      _
    $region3: #{tpu_custom_call.1} parent=1 // pred_check_branch
      %11 = sbr.rel (0) target = $region5
    $region4: #{tpu_custom_call.1} parent=1 // pred_region
      %13 = vsyncadd [#allocation3], 0
      %s15 = sshll.u32 %s0, 4
      %s16 = int_to_ptr.hbm [resolvable:$true] %s15
      %s17 = sshll.u32 [#allocation2], 4
      %s18 = int_to_ptr.vmem [resolvable:$true] %s17
      %20 = dma.hbm_to_vmem [thread:$0]  %s16, 64, %s18, [#allocation3]
    $region5: #{tpu_custom_call.1} parent=1 // pred_fallthru
      _
    // Predicated region
    $region6: #{tpu_custom_call.1} parent=1 // pred_check
      _
    $region7: #{tpu_custom_call.1} parent=1 // pred_check_branch
      %22 = sbr.rel (0) target = $region9
    $region8: #{tpu_custom_call.1} parent=1 // pred_region
      %24 = vsyncadd [#allocation6], 0
      %s25 = sshll.u32 %s1, 4
      %s26 = int_to_ptr.hbm [resolvable:$true] %s25
      %s27 = sshll.u32 [#allocation5], 4
      %s28 = int_to_ptr.vmem [resolvable:$true] %s27
      %33 = dma.hbm_to_vmem [thread:$0]  %s26, 5120, %s28, [#allocation6], 1024, 1024, 64
    $region9: #{tpu_custom_call.1} parent=1 // pred_fallthru
      _
    // Predicated region
    $region10: #{tpu_custom_call.1} parent=1 // pred_check
      _
    $region11: #{tpu_custom_call.1} parent=1 // pred_check_branch
      %35 = sbr.rel (0) target = $region13
    $region12: #{tpu_custom_call.1} parent=1 // pred_region
      %37 = dma.done [#allocation3], 64
    $region13: #{tpu_custom_call.1} parent=1 // pred_fallthru
      _
    // Predicated region
    $region14: #{tpu_custom_call.1} parent=1 // pred_check
      _
    $region15: #{tpu_custom_call.1} parent=1 // pred_check_branch
      %39 = sbr.rel (0) target = $region17
    $region16: #{tpu_custom_call.1} parent=1 // pred_region
      %41 = dma.done [#allocation6], 5120
    $region17: #{tpu_custom_call.1} parent=1 // pred_fallthru
      _
    %v43 = vld [vmem:[#allocation2] sm:$0xf]
    %v44 = vld [vmem:[#allocation5] sm:$0xff]
    %v45 = vld [vmem:[#allocation5 + $0x8] sm:$0xff]
    %v46 = vld [vmem:[#allocation5 + $0x10] sm:$0xff]
    %v47 = vld [vmem:[#allocation5 + $0x18] sm:$0xff]
    %v48 = vld [vmem:[#allocation5 + $0x20] sm:$0xff]
    %v49 = vld [vmem:[#allocation5 + $0x28] sm:$0xff]
    %v50 = vld [vmem:[#allocation5 + $0x30] sm:$0xff]
    %v51 = vld [vmem:[#allocation5 + $0x38] sm:$0xff]
    %v52 = vld [vmem:[#allocation5 + $0x40] sm:$0xff]
    %v53 = vld [vmem:[#allocation5 + $0x48] sm:$0xff]
    %v54 = vld [vmem:[#allocation5 + $0x50] sm:$0xff]
    %v55 = vld [vmem:[#allocation5 + $0x58] sm:$0xff]
    %v56 = vld [vmem:[#allocation5 + $0x60] sm:$0xff]
    %v57 = vld [vmem:[#allocation5 + $0x68] sm:$0xff]
    %v58 = vld [vmem:[#allocation5 + $0x70] sm:$0xff]
    %v59 = vld [vmem:[#allocation5 + $0x78] sm:$0xff]
    %v60 = vld [vmem:[#allocation5 + $0x80] sm:$0xff]
    %v61 = vld [vmem:[#allocation5 + $0x88] sm:$0xff]
    %v62 = vld [vmem:[#allocation5 + $0x90] sm:$0xff]
    %v63 = vld [vmem:[#allocation5 + $0x98] sm:$0xff]
    %v64 = vld [vmem:[#allocation5 + $0xa0] sm:$0xff]
    %v65 = vld [vmem:[#allocation5 + $0xa8] sm:$0xff]
    %v66 = vld [vmem:[#allocation5 + $0xb0] sm:$0xff]
    %v67 = vld [vmem:[#allocation5 + $0xb8] sm:$0xff]
    %v68 = vld [vmem:[#allocation5 + $0xc0] sm:$0xff]
    %v69 = vld [vmem:[#allocation5 + $0xc8] sm:$0xff]
    %v70 = vld [vmem:[#allocation5 + $0xd0] sm:$0xff]
    %v71 = vld [vmem:[#allocation5 + $0xd8] sm:$0xff]
    %v72 = vld [vmem:[#allocation5 + $0xe0] sm:$0xff]
    %v73 = vld [vmem:[#allocation5 + $0xe8] sm:$0xff]
    %v74 = vld [vmem:[#allocation5 + $0xf0] sm:$0xff]
    %v75 = vld [vmem:[#allocation5 + $0xf8] sm:$0xff]
    %v76 = vld [vmem:[#allocation5 + $0x100] sm:$0x33]
    %v77 = vld [vmem:[#allocation5 + $0x108] sm:$0x33]
    %v78 = vld [vmem:[#allocation5 + $0x110] sm:$0x33]
    %v79 = vld [vmem:[#allocation5 + $0x118] sm:$0x33]
    %v80 = vld [vmem:[#allocation5 + $0x120] sm:$0x33]
    %v81 = vld [vmem:[#allocation5 + $0x128] sm:$0x33]
    %v82 = vld [vmem:[#allocation5 + $0x130] sm:$0x33]
    %v83 = vld [vmem:[#allocation5 + $0x138] sm:$0x33]
    %v124 = vunpack.c.l.b16 %v44
    %v125 = vunpack.c.h.b16 %v44
    %v126 = vunpack.c.l.b16 %v45
    %v127 = vunpack.c.h.b16 %v45
    %v128 = vunpack.c.l.b16 %v46
    %v129 = vunpack.c.h.b16 %v46
    %v130 = vunpack.c.l.b16 %v47
    %v131 = vunpack.c.h.b16 %v47
    %v132 = vunpack.c.l.b16 %v48
    %v133 = vunpack.c.h.b16 %v48
    %v134 = vunpack.c.l.b16 %v49
    %v135 = vunpack.c.h.b16 %v49
    %v136 = vunpack.c.l.b16 %v50
    %v137 = vunpack.c.h.b16 %v50
    %v138 = vunpack.c.l.b16 %v51
    %v139 = vunpack.c.h.b16 %v51
    %v140 = vunpack.c.l.b16 %v52
    %v141 = vunpack.c.h.b16 %v52
    %v142 = vunpack.c.l.b16 %v53
    %v143 = vunpack.c.h.b16 %v53
    %v144 = vunpack.c.l.b16 %v54
    %v145 = vunpack.c.h.b16 %v54
    %v146 = vunpack.c.l.b16 %v55
    %v147 = vunpack.c.h.b16 %v55
    %v148 = vunpack.c.l.b16 %v56
    %v149 = vunpack.c.h.b16 %v56
    %v150 = vunpack.c.l.b16 %v57
    %v151 = vunpack.c.h.b16 %v57
    %v152 = vunpack.c.l.b16 %v58
    %v153 = vunpack.c.h.b16 %v58
    %v154 = vunpack.c.l.b16 %v59
    %v155 = vunpack.c.h.b16 %v59
    %v156 = vunpack.c.l.b16 %v60
    %v157 = vunpack.c.h.b16 %v60
    %v158 = vunpack.c.l.b16 %v61
    %v159 = vunpack.c.h.b16 %v61
    %v160 = vunpack.c.l.b16 %v62
    %v161 = vunpack.c.h.b16 %v62
    %v162 = vunpack.c.l.b16 %v63
    %v163 = vunpack.c.h.b16 %v63
    %v164 = vunpack.c.l.b16 %v64
    %v165 = vunpack.c.h.b16 %v64
    %v166 = vunpack.c.l.b16 %v65
    %v167 = vunpack.c.h.b16 %v65
    %v168 = vunpack.c.l.b16 %v66
    %v169 = vunpack.c.h.b16 %v66
    %v170 = vunpack.c.l.b16 %v67
    %v171 = vunpack.c.h.b16 %v67
    %v172 = vunpack.c.l.b16 %v68
    %v173 = vunpack.c.h.b16 %v68
    %v174 = vunpack.c.l.b16 %v69
    %v175 = vunpack.c.h.b16 %v69
    %v176 = vunpack.c.l.b16 %v70
    %v177 = vunpack.c.h.b16 %v70
    %v178 = vunpack.c.l.b16 %v71
    %v179 = vunpack.c.h.b16 %v71
    %v180 = vunpack.c.l.b16 %v72
    %v181 = vunpack.c.h.b16 %v72
    %v182 = vunpack.c.l.b16 %v73
    %v183 = vunpack.c.h.b16 %v73
    %v184 = vunpack.c.l.b16 %v74
    %v185 = vunpack.c.h.b16 %v74
    %v186 = vunpack.c.l.b16 %v75
    %v187 = vunpack.c.h.b16 %v75
    %v188 = vunpack.c.l.b16 %v76
    %v189 = vunpack.c.h.b16 %v76
    %v190 = vunpack.c.l.b16 %v77
    %v191 = vunpack.c.h.b16 %v77
    %v192 = vunpack.c.l.b16 %v78
    %v193 = vunpack.c.h.b16 %v78
    %v194 = vunpack.c.l.b16 %v79
    %v195 = vunpack.c.h.b16 %v79
    %v196 = vunpack.c.l.b16 %v80
    %v197 = vunpack.c.h.b16 %v80
    %v198 = vunpack.c.l.b16 %v81
    %v199 = vunpack.c.h.b16 %v81
    %v200 = vunpack.c.l.b16 %v82
    %v201 = vunpack.c.h.b16 %v82
    %v202 = vunpack.c.l.b16 %v83
    %v203 = vunpack.c.h.b16 %v83
    %v204 = vpack.c.b16 %v140, %v124
    %v205 = vpack.c.b16 %v141, %v125
    %v206 = vpack.c.b16 %v142, %v126
    %v207 = vpack.c.b16 %v143, %v127
    %v208 = vpack.c.b16 %v144, %v128
    %v209 = vpack.c.b16 %v145, %v129
    %v210 = vpack.c.b16 %v146, %v130
    %v211 = vpack.c.b16 %v147, %v131
    %v212 = vpack.c.b16 %v148, %v132
    %v213 = vpack.c.b16 %v149, %v133
    %v214 = vpack.c.b16 %v150, %v134
    %v215 = vpack.c.b16 %v151, %v135
    %v216 = vpack.c.b16 %v152, %v136
    %v217 = vpack.c.b16 %v153, %v137
    %v218 = vpack.c.b16 %v154, %v138
    %v219 = vpack.c.b16 %v155, %v139
    %v220 = vpack.c.b16 %v172, %v156
    %v221 = vpack.c.b16 %v173, %v157
    %v222 = vpack.c.b16 %v174, %v158
    %v223 = vpack.c.b16 %v175, %v159
    %v224 = vpack.c.b16 %v176, %v160
    %v225 = vpack.c.b16 %v177, %v161
    %v226 = vpack.c.b16 %v178, %v162
    %v227 = vpack.c.b16 %v179, %v163
    %v228 = vpack.c.b16 %v180, %v164
    %v229 = vpack.c.b16 %v181, %v165
    %v230 = vpack.c.b16 %v182, %v166
    %v231 = vpack.c.b16 %v183, %v167
    %v232 = vpack.c.b16 %v184, %v168
    %v233 = vpack.c.b16 %v185, %v169
    %v234 = vpack.c.b16 %v186, %v170
    %v235 = vpack.c.b16 %v187, %v171
    %v236 = vpack.c.b16 %v188, %v188
    %v237 = vpack.c.b16 %v189, %v189
    %v238 = vpack.c.b16 %v190, %v190
    %v239 = vpack.c.b16 %v191, %v191
    %v240 = vpack.c.b16 %v192, %v192
    %v241 = vpack.c.b16 %v193, %v193
    %v242 = vpack.c.b16 %v194, %v194
    %v243 = vpack.c.b16 %v195, %v195
    %v244 = vpack.c.b16 %v196, %v196
    %v245 = vpack.c.b16 %v197, %v197
    %v246 = vpack.c.b16 %v198, %v198
    %v247 = vpack.c.b16 %v199, %v199
    %v248 = vpack.c.b16 %v200, %v200
    %v249 = vpack.c.b16 %v201, %v201
    %v250 = vpack.c.b16 %v202, %v202
    %v251 = vpack.c.b16 %v203, %v203
    %vm284 = vcmask 293888
    %v286 = vsel %vm284, %v43, 0
    %vm288 = vcmask 1041408
    %v290 = vsel %vm288, %v236, 0
    %v293 = vsel %vm288, %v237, 0
    %v296 = vsel %vm288, %v238, 0
    %v299 = vsel %vm288, %v239, 0
    %v302 = vsel %vm288, %v240, 0
    %v305 = vsel %vm288, %v241, 0
    %v308 = vsel %vm288, %v242, 0
    %v311 = vsel %vm288, %v243, 0
    %v314 = vsel %vm288, %v244, 0
    %v317 = vsel %vm288, %v245, 0
    %v320 = vsel %vm288, %v246, 0
    %v323 = vsel %vm288, %v247, 0
    %v326 = vsel %vm288, %v248, 0
    %v329 = vsel %vm288, %v249, 0
    %v332 = vsel %vm288, %v250, 0
    %v335 = vsel %vm288, %v251, 0
    %337 = vmatpush.bf16.msra.mxu0 0
    %338 = vmatpush.bf16.msra.mxu0 0
    %339 = vmatpush.bf16.msra.mxu0 0
    %340 = vmatpush.bf16.msra.mxu0 0
    %341 = vmatpush.bf16.msra.mxu0 0
    %342 = vmatpush.bf16.msra.mxu0 %v290
    %343 = vmatpush.bf16.msra.mxu0 %v220
    %344 = vmatpush.bf16.msra.mxu0 %v204
    %345 = vmatmul.bf16.gmra.mxu0 %v286
    %v346 = vpop.f32.mrf.mxu0
    %v347 = vadd.f32 0.0, %v346
    %v348 = vpop.f32.mrf.mxu0
    %349 = vdwg.mxu0
    %350 = vmatpush.bf16.msra.mxu0 0
    %351 = vmatpush.bf16.msra.mxu0 0
    %352 = vmatpush.bf16.msra.mxu0 0
    %353 = vmatpush.bf16.msra.mxu0 0
    %354 = vmatpush.bf16.msra.mxu0 0
    %355 = vmatpush.bf16.msra.mxu0 %v293
    %356 = vmatpush.bf16.msra.mxu0 %v221
    %357 = vmatpush.bf16.msra.mxu0 %v205
    %358 = vmatmul.bf16.gmra.mxu0 %v286
    %v359 = vpop.f32.mrf.mxu0
    %v360 = vadd.f32 0.0, %v359
    %v361 = vpop.f32.mrf.mxu0
    %362 = vdwg.mxu0
    %363 = vmatpush.bf16.msra.mxu0 0
    %364 = vmatpush.bf16.msra.mxu0 0
    %365 = vmatpush.bf16.msra.mxu0 0
    %366 = vmatpush.bf16.msra.mxu0 0
    %367 = vmatpush.bf16.msra.mxu0 0
    %368 = vmatpush.bf16.msra.mxu0 %v296
    %369 = vmatpush.bf16.msra.mxu0 %v222
    %370 = vmatpush.bf16.msra.mxu0 %v206
    %371 = vmatmul.bf16.gmra.mxu0 %v286
    %v372 = vpop.f32.mrf.mxu0
    %v373 = vadd.f32 0.0, %v372
    %v374 = vpop.f32.mrf.mxu0
    %375 = vdwg.mxu0
    %376 = vmatpush.bf16.msra.mxu0 0
    %377 = vmatpush.bf16.msra.mxu0 0
    %378 = vmatpush.bf16.msra.mxu0 0
    %379 = vmatpush.bf16.msra.mxu0 0
    %380 = vmatpush.bf16.msra.mxu0 0
    %381 = vmatpush.bf16.msra.mxu0 %v299
    %382 = vmatpush.bf16.msra.mxu0 %v223
    %383 = vmatpush.bf16.msra.mxu0 %v207
    %384 = vmatmul.bf16.gmra.mxu0 %v286
    %v385 = vpop.f32.mrf.mxu0
    %v386 = vadd.f32 0.0, %v385
    %v387 = vpop.f32.mrf.mxu0
    %388 = vdwg.mxu0
    %389 = vmatpush.bf16.msra.mxu0 0
    %390 = vmatpush.bf16.msra.mxu0 0
    %391 = vmatpush.bf16.msra.mxu0 0
    %392 = vmatpush.bf16.msra.mxu0 0
    %393 = vmatpush.bf16.msra.mxu0 0
    %394 = vmatpush.bf16.msra.mxu0 %v302
    %395 = vmatpush.bf16.msra.mxu0 %v224
    %396 = vmatpush.bf16.msra.mxu0 %v208
    %397 = vmatmul.bf16.gmra.mxu0 %v286
    %v398 = vpop.f32.mrf.mxu0
    %v399 = vadd.f32 0.0, %v398
    %v400 = vpop.f32.mrf.mxu0
    %401 = vdwg.mxu0
    %402 = vmatpush.bf16.msra.mxu0 0
    %403 = vmatpush.bf16.msra.mxu0 0
    %404 = vmatpush.bf16.msra.mxu0 0
    %405 = vmatpush.bf16.msra.mxu0 0
    %406 = vmatpush.bf16.msra.mxu0 0
    %407 = vmatpush.bf16.msra.mxu0 %v305
    %408 = vmatpush.bf16.msra.mxu0 %v225
    %409 = vmatpush.bf16.msra.mxu0 %v209
    %410 = vmatmul.bf16.gmra.mxu0 %v286
    %v411 = vpop.f32.mrf.mxu0
    %v412 = vadd.f32 0.0, %v411
    %v413 = vpop.f32.mrf.mxu0
    %414 = vdwg.mxu0
    %415 = vmatpush.bf16.msra.mxu0 0
    %416 = vmatpush.bf16.msra.mxu0 0
    %417 = vmatpush.bf16.msra.mxu0 0
    %418 = vmatpush.bf16.msra.mxu0 0
    %419 = vmatpush.bf16.msra.mxu0 0
    %420 = vmatpush.bf16.msra.mxu0 %v308
    %421 = vmatpush.bf16.msra.mxu0 %v226
    %422 = vmatpush.bf16.msra.mxu0 %v210
    %423 = vmatmul.bf16.gmra.mxu0 %v286
    %v424 = vpop.f32.mrf.mxu0
    %v425 = vadd.f32 0.0, %v424
    %v426 = vpop.f32.mrf.mxu0
    %427 = vdwg.mxu0
    %428 = vmatpush.bf16.msra.mxu0 0
    %429 = vmatpush.bf16.msra.mxu0 0
    %430 = vmatpush.bf16.msra.mxu0 0
    %431 = vmatpush.bf16.msra.mxu0 0
    %432 = vmatpush.bf16.msra.mxu0 0
    %433 = vmatpush.bf16.msra.mxu0 %v311
    %434 = vmatpush.bf16.msra.mxu0 %v227
    %435 = vmatpush.bf16.msra.mxu0 %v211
    %436 = vmatmul.bf16.gmra.mxu0 %v286
    %v437 = vpop.f32.mrf.mxu0
    %v438 = vadd.f32 0.0, %v437
    %v439 = vpop.f32.mrf.mxu0
    %440 = vdwg.mxu0
    %441 = vmatpush.bf16.msra.mxu0 0
    %442 = vmatpush.bf16.msra.mxu0 0
    %443 = vmatpush.bf16.msra.mxu0 0
    %444 = vmatpush.bf16.msra.mxu0 0
    %445 = vmatpush.bf16.msra.mxu0 0
    %446 = vmatpush.bf16.msra.mxu0 %v314
    %447 = vmatpush.bf16.msra.mxu0 %v228
    %448 = vmatpush.bf16.msra.mxu0 %v212
    %449 = vmatmul.bf16.gmra.mxu0 %v286
    %v450 = vpop.f32.mrf.mxu0
    %v451 = vadd.f32 0.0, %v450
    %v452 = vpop.f32.mrf.mxu0
    %453 = vdwg.mxu0
    %454 = vmatpush.bf16.msra.mxu0 0
    %455 = vmatpush.bf16.msra.mxu0 0
    %456 = vmatpush.bf16.msra.mxu0 0
    %457 = vmatpush.bf16.msra.mxu0 0
    %458 = vmatpush.bf16.msra.mxu0 0
    %459 = vmatpush.bf16.msra.mxu0 %v317
    %460 = vmatpush.bf16.msra.mxu0 %v229
    %461 = vmatpush.bf16.msra.mxu0 %v213
    %462 = vmatmul.bf16.gmra.mxu0 %v286
    %v463 = vpop.f32.mrf.mxu0
    %v464 = vadd.f32 0.0, %v463
    %v465 = vpop.f32.mrf.mxu0
    %466 = vdwg.mxu0
    %467 = vmatpush.bf16.msra.mxu0 0
    %468 = vmatpush.bf16.msra.mxu0 0
    %469 = vmatpush.bf16.msra.mxu0 0
    %470 = vmatpush.bf16.msra.mxu0 0
    %471 = vmatpush.bf16.msra.mxu0 0
    %472 = vmatpush.bf16.msra.mxu0 %v320
    %473 = vmatpush.bf16.msra.mxu0 %v230
    %474 = vmatpush.bf16.msra.mxu0 %v214
    %475 = vmatmul.bf16.gmra.mxu0 %v286
    %v476 = vpop.f32.mrf.mxu0
    %v477 = vadd.f32 0.0, %v476
    %v478 = vpop.f32.mrf.mxu0
    %479 = vdwg.mxu0
    %480 = vmatpush.bf16.msra.mxu0 0
    %481 = vmatpush.bf16.msra.mxu0 0
    %482 = vmatpush.bf16.msra.mxu0 0
    %483 = vmatpush.bf16.msra.mxu0 0
    %484 = vmatpush.bf16.msra.mxu0 0
    %485 = vmatpush.bf16.msra.mxu0 %v323
    %486 = vmatpush.bf16.msra.mxu0 %v231
    %487 = vmatpush.bf16.msra.mxu0 %v215
    %488 = vmatmul.bf16.gmra.mxu0 %v286
    %v489 = vpop.f32.mrf.mxu0
    %v490 = vadd.f32 0.0, %v489
    %v491 = vpop.f32.mrf.mxu0
    %492 = vdwg.mxu0
    %493 = vmatpush.bf16.msra.mxu0 0
    %494 = vmatpush.bf16.msra.mxu0 0
    %495 = vmatpush.bf16.msra.mxu0 0
    %496 = vmatpush.bf16.msra.mxu0 0
    %497 = vmatpush.bf16.msra.mxu0 0
    %498 = vmatpush.bf16.msra.mxu0 %v326
    %499 = vmatpush.bf16.msra.mxu0 %v232
    %500 = vmatpush.bf16.msra.mxu0 %v216
    %501 = vmatmul.bf16.gmra.mxu0 %v286
    %v502 = vpop.f32.mrf.mxu0
    %v503 = vadd.f32 0.0, %v502
    %v504 = vpop.f32.mrf.mxu0
    %505 = vdwg.mxu0
    %506 = vmatpush.bf16.msra.mxu0 0
    %507 = vmatpush.bf16.msra.mxu0 0
    %508 = vmatpush.bf16.msra.mxu0 0
    %509 = vmatpush.bf16.msra.mxu0 0
    %510 = vmatpush.bf16.msra.mxu0 0
    %511 = vmatpush.bf16.msra.mxu0 %v329
    %512 = vmatpush.bf16.msra.mxu0 %v233
    %513 = vmatpush.bf16.msra.mxu0 %v217
    %514 = vmatmul.bf16.gmra.mxu0 %v286
    %v515 = vpop.f32.mrf.mxu0
    %v516 = vadd.f32 0.0, %v515
    %v517 = vpop.f32.mrf.mxu0
    %518 = vdwg.mxu0
    %519 = vmatpush.bf16.msra.mxu0 0
    %520 = vmatpush.bf16.msra.mxu0 0
    %521 = vmatpush.bf16.msra.mxu0 0
    %522 = vmatpush.bf16.msra.mxu0 0
    %523 = vmatpush.bf16.msra.mxu0 0
    %524 = vmatpush.bf16.msra.mxu0 %v332
    %525 = vmatpush.bf16.msra.mxu0 %v234
    %526 = vmatpush.bf16.msra.mxu0 %v218
    %527 = vmatmul.bf16.gmra.mxu0 %v286
    %v528 = vpop.f32.mrf.mxu0
    %v529 = vadd.f32 0.0, %v528
    %v530 = vpop.f32.mrf.mxu0
    %531 = vdwg.mxu0
    %532 = vmatpush.bf16.msra.mxu0 0
    %533 = vmatpush.bf16.msra.mxu0 0
    %534 = vmatpush.bf16.msra.mxu0 0
    %535 = vmatpush.bf16.msra.mxu0 0
    %536 = vmatpush.bf16.msra.mxu0 0
    %537 = vmatpush.bf16.msra.mxu0 %v335
    %538 = vmatpush.bf16.msra.mxu0 %v235
    %539 = vmatpush.bf16.msra.mxu0 %v219
    %540 = vmatmul.bf16.gmra.mxu0 %v286
    %v541 = vpop.f32.mrf.mxu0
    %v542 = vadd.f32 0.0, %v541
    %v543 = vpop.f32.mrf.mxu0
    %544 = vdwg.mxu0
    %545 = vst [vmem:[#allocation7] sm:$0xff] %v347
    %546 = vst [vmem:[#allocation7 + $0x8] sm:$0xff] %v360
    %547 = vst [vmem:[#allocation7 + $0x10] sm:$0xff] %v373
    %548 = vst [vmem:[#allocation7 + $0x18] sm:$0xff] %v386
    %549 = vst [vmem:[#allocation7 + $0x20] sm:$0xff] %v399
    %550 = vst [vmem:[#allocation7 + $0x28] sm:$0xff] %v412
    %551 = vst [vmem:[#allocation7 + $0x30] sm:$0xff] %v425
    %552 = vst [vmem:[#allocation7 + $0x38] sm:$0xff] %v438
    %553 = vst [vmem:[#allocation7 + $0x40] sm:$0xff] %v451
    %554 = vst [vmem:[#allocation7 + $0x48] sm:$0xff] %v464
    %555 = vst [vmem:[#allocation7 + $0x50] sm:$0xff] %v477
    %556 = vst [vmem:[#allocation7 + $0x58] sm:$0xff] %v490
    %557 = vst [vmem:[#allocation7 + $0x60] sm:$0xff] %v503
    %558 = vst [vmem:[#allocation7 + $0x68] sm:$0xff] %v516
    %559 = vst [vmem:[#allocation7 + $0x70] sm:$0xff] %v529
    %560 = vst [vmem:[#allocation7 + $0x78] sm:$0xff] %v542
    // Predicated region
    $region18: #{tpu_custom_call.1} parent=1 // pred_check
      _
    $region19: #{tpu_custom_call.1} parent=1 // pred_check_branch
      %562 = sbr.rel (0) target = $region21
    $region20: #{tpu_custom_call.1} parent=1 // pred_region
      %564 = vsyncadd [#allocation4], 0
      %s566 = sshll.u32 [#allocation7], 4
      %s567 = int_to_ptr.vmem [resolvable:$true] %s566
      %s568 = sshll.u32 %s2, 4
      %s569 = int_to_ptr.hbm [resolvable:$true] %s568
      %571 = dma.vmem_to_hbm [thread:$0]  %s567, 2048, %s569, [#allocation4]
    $region21: #{tpu_custom_call.1} parent=1 // pred_fallthru
      _
    // Predicated region
    $region22: #{tpu_custom_call.1} parent=1 // pred_check
      _
    $region23: #{tpu_custom_call.1} parent=1 // pred_check_branch
      %573 = sbr.rel (0) target = $region25
    $region24: #{tpu_custom_call.1} parent=1 // pred_region
      %575 = dma.done [#allocation4], 2048
    $region25: #{tpu_custom_call.1} parent=1 // pred_fallthru
      _
    %576 = vsyncpa [#allocation3], 1
    %577 = vsyncpa [#allocation6], 1
    %578 = vsyncpa [#allocation4], 1

</llo_original>
